<compile_context>
chip_gen: v5e
topology: v5e:2x2
jax: 0.10.0
libtpu: 0.0.40
codegen_flags: <defaults>
</compile_context>

<pallas_src>
import functools

import jax
import jax.numpy as jnp
from jax.experimental import pallas as pl
from jax.experimental.pallas import tpu as pltpu


# ----------------------------- Pallas kernel ------------------------------ #

def _densnet_kernel(x_ref, w1_ref, b1_ref, w2_ref, b2_ref, o_ref):
    """Fused relu -> 1x1 conv -> relu -> 1x1 conv -> channel softmax.

    x_ref : (C, TN)   input tile, channels on sublanes, batch*time on lanes
    w1/w2 : (C, C)    1x1 conv weights
    b1/b2 : (C, 1)    biases (broadcast along lanes)
    o_ref : (C, TN)   output tile (softmax over channel axis = axis 0)
    """
    x = x_ref[...]                                     # (C, TN)

    # relu -> conv1 (+bias)
    h = jnp.maximum(x, 0.0)
    h = jnp.dot(w1_ref[...], h, preferred_element_type=jnp.float32) + b1_ref[...]

    # relu -> conv2 (+bias)
    h = jnp.maximum(h, 0.0)
    h = jnp.dot(w2_ref[...], h, preferred_element_type=jnp.float32) + b2_ref[...]

    # softmax over channels (sublane axis).
    m = jnp.max(h, axis=0, keepdims=True)              # (1, TN)
    e = jnp.exp(h - m)                                 # EUP
    s = jnp.sum(e, axis=0, keepdims=True)              # XLU reduce
    o_ref[...] = (e / s).astype(o_ref.dtype)


# ----------------------------- Python wrapper ------------------------------ #

def densnet_pallas(x, w1, b1, w2, b2, *, tn=128):
    """DensNet.forward.  x: (B, C, T) float32 -> (B, C, T) float32."""
    B, C, T = x.shape
    N = B * T

    # Fold batch into the lane axis: (B, C, T) -> (C, B*T).  Pure layout
    # plumbing done once in the wrapper so every in-kernel matmul/store is
    # lane-dense.
    x2d = jnp.transpose(x, (1, 0, 2)).reshape(C, N)

    # Pad the lane axis to a multiple of the tile width so stores are unmasked.
    n_tiles = pl.cdiv(N, tn)
    n_pad = n_tiles * tn
    if n_pad != N:
        x2d = jnp.pad(x2d, ((0, 0), (0, n_pad - N)))

    out2d = pl.pallas_call(
        _densnet_kernel,
        out_shape=jax.ShapeDtypeStruct((C, n_pad), x.dtype),
        grid=(n_tiles,),
        in_specs=[
            pl.BlockSpec((C, tn), lambda i: (0, i)),   # activations: tile lanes
            pl.BlockSpec((C, C), lambda i: (0, 0)),    # w1 (resident every step)
            pl.BlockSpec((C, 1), lambda i: (0, 0)),    # b1
            pl.BlockSpec((C, C), lambda i: (0, 0)),    # w2
            pl.BlockSpec((C, 1), lambda i: (0, 0)),    # b2
        ],
        out_specs=pl.BlockSpec((C, tn), lambda i: (0, i)),
        compiler_params=pltpu.CompilerParams(
            dimension_semantics=("parallel",)),        # shards across v7x's 2 TCs
    )(x2d, w1, b1, w2, b2)

    # Drop padding and restore (B, C, T).
    out2d = out2d[:, :N]
    return out2d.reshape(C, B, T).transpose(1, 0, 2)


# ---------------------------- pure-JAX reference --------------------------- #

def densnet_ref(x, w1, b1, w2, b2):
    h = jnp.maximum(x, 0.0)
    h = jnp.einsum("oc,bct->bot", w1, h) + b1[None]
    h = jnp.maximum(h, 0.0)
    h = jnp.einsum("oc,bct->bot", w2, h) + b2[None]
    return jax.nn.softmax(h, axis=1)


# ---------------------------------- main ----------------------------------- #

if __name__ == "__main__":
    # Small shapes consistent with the module's forward:
    #   batch=2, channels=16, time=128  ->  lane axis B*T = 256 (two 128-wide
    #   lane-dense tiles, >= 2 independent "parallel" blocks for v7x).
    B, C, T = 2, 16, 128

    key = jax.random.PRNGKey(0)
    kx, k1, k2, k3, k4 = jax.random.split(key, 5)
    x = jax.random.normal(kx, (B, C, T), jnp.float32)

    scale = 0.3
    # Conv1d(C, C, 1).weight is (C_out, C_in, 1); store the squeezed (C, C).
    w1 = scale * jax.random.normal(k1, (C, C), jnp.float32)
    b1 = scale * jax.random.normal(k2, (C, 1), jnp.float32)
    w2 = scale * jax.random.normal(k3, (C, C), jnp.float32)
    b2 = scale * jax.random.normal(k4, (C, 1), jnp.float32)

    out = densnet_pallas(x, w1, b1, w2, b2)
    out = jax.block_until_ready(out)

    ref = densnet_ref(x, w1, b1, w2, b2)
    assert out.shape == (B, C, T), out.shape
    max_err = float(jnp.max(jnp.abs(out - ref)))
    assert jnp.allclose(out, ref, rtol=1e-5, atol=1e-5), max_err
    # softmax rows must sum to 1 over channels
    assert jnp.allclose(jnp.sum(out, axis=1), 1.0, atol=1e-5)

    print("KERNEL_OK")
</pallas_src>

<mosaic_0001>
module attributes {stable_mosaic.version = 11 : i64} {
  func.func @_densnet_kernel(%arg0: i32, %arg1: memref<16x128xf32, #tpu.memory_space<vmem>>, %arg2: memref<16x16xf32, #tpu.memory_space<vmem>>, %arg3: memref<16x1xf32, #tpu.memory_space<vmem>>, %arg4: memref<16x16xf32, #tpu.memory_space<vmem>>, %arg5: memref<16x1xf32, #tpu.memory_space<vmem>>, %arg6: memref<16x128xf32, #tpu.memory_space<vmem>>) attributes {dimension_semantics = [#tpu.dimension_semantics<parallel>], iteration_bounds = array<i64: 2>, scalar_prefetch = 0 : i64, scratch_operands = 0 : i64, tpu.core_type = #tpu.core_type<tc>, window_params = [{transform_indices = @transform_0, window_bounds = array<i64: 16, 128>}, {pipeline_mode = #tpu.pipeline_mode<synchronous>, transform_indices = @transform_1, window_bounds = array<i64: 16, 16>}, {pipeline_mode = #tpu.pipeline_mode<synchronous>, transform_indices = @transform_2, window_bounds = array<i64: 16, 1>}, {pipeline_mode = #tpu.pipeline_mode<synchronous>, transform_indices = @transform_3, window_bounds = array<i64: 16, 16>}, {pipeline_mode = #tpu.pipeline_mode<synchronous>, transform_indices = @transform_4, window_bounds = array<i64: 16, 1>}, {transform_indices = @transform_5, window_bounds = array<i64: 16, 128>}]} {
    %c0 = arith.constant 0 : index
    %c0_0 = arith.constant 0 : index
    %0 = vector.load %arg1[%c0, %c0_0] : memref<16x128xf32, #tpu.memory_space<vmem>>, vector<16x128xf32>
    %cst = arith.constant 0.000000e+00 : f32
    %1 = vector.broadcast %cst : f32 to vector<16x128xf32>
    %2 = arith.maximumf %0, %1 : vector<16x128xf32>
    %c0_1 = arith.constant 0 : index
    %c0_2 = arith.constant 0 : index
    %3 = vector.load %arg2[%c0_1, %c0_2] : memref<16x16xf32, #tpu.memory_space<vmem>>, vector<16x16xf32>
    %cst_3 = arith.constant dense<0.000000e+00> : vector<16x128xf32>
    %4 = tpu.matmul %3, %2, %cst_3 {dimension_numbers = #tpu.dot_dimension_numbers<[1], [0], [0], [1], [0, 0, 1, 1], [], []>} : vector<16x16xf32>, vector<16x128xf32>, vector<16x128xf32> -> vector<16x128xf32>
    %c0_4 = arith.constant 0 : index
    %c0_5 = arith.constant 0 : index
    %5 = vector.load %arg3[%c0_4, %c0_5] : memref<16x1xf32, #tpu.memory_space<vmem>>, vector<16x1xf32>
    %6 = vector.broadcast %5 : vector<16x1xf32> to vector<16x128xf32>
    %7 = arith.addf %4, %6 : vector<16x128xf32>
    %cst_6 = arith.constant 0.000000e+00 : f32
    %8 = vector.broadcast %cst_6 : f32 to vector<16x128xf32>
    %9 = arith.maximumf %7, %8 : vector<16x128xf32>
    %c0_7 = arith.constant 0 : index
    %c0_8 = arith.constant 0 : index
    %10 = vector.load %arg4[%c0_7, %c0_8] : memref<16x16xf32, #tpu.memory_space<vmem>>, vector<16x16xf32>
    %cst_9 = arith.constant dense<0.000000e+00> : vector<16x128xf32>
    %11 = tpu.matmul %10, %9, %cst_9 {dimension_numbers = #tpu.dot_dimension_numbers<[1], [0], [0], [1], [0, 0, 1, 1], [], []>} : vector<16x16xf32>, vector<16x128xf32>, vector<16x128xf32> -> vector<16x128xf32>
    %c0_10 = arith.constant 0 : index
    %c0_11 = arith.constant 0 : index
    %12 = vector.load %arg5[%c0_10, %c0_11] : memref<16x1xf32, #tpu.memory_space<vmem>>, vector<16x1xf32>
    %13 = vector.broadcast %12 : vector<16x1xf32> to vector<16x128xf32>
    %14 = arith.addf %11, %13 : vector<16x128xf32>
    %cst_12 = arith.constant dense<0xFF800000> : vector<128xf32>
    %15 = vector.multi_reduction <maximumf>, %14, %cst_12 [0] : vector<16x128xf32> to vector<128xf32>
    %16 = vector.shape_cast %15 : vector<128xf32> to vector<1x128xf32>
    %17 = vector.broadcast %16 : vector<1x128xf32> to vector<16x128xf32>
    %18 = arith.subf %14, %17 : vector<16x128xf32>
    %19 = math.exp %18 : vector<16x128xf32>
    %cst_13 = arith.constant dense<0.000000e+00> : vector<128xf32>
    %20 = vector.multi_reduction <add>, %19, %cst_13 [0] : vector<16x128xf32> to vector<128xf32>
    %21 = vector.shape_cast %20 : vector<128xf32> to vector<1x128xf32>
    %22 = vector.broadcast %21 : vector<1x128xf32> to vector<16x128xf32>
    %23 = arith.divf %19, %22 : vector<16x128xf32>
    %c0_14 = arith.constant 0 : index
    %c0_15 = arith.constant 0 : index
    %24 = vector.load %arg6[%c0_14, %c0_15] : memref<16x128xf32, #tpu.memory_space<vmem>>, vector<16x128xf32>
    tpu.vector_store %arg6[%c0_14, %c0_15], %23 {strides = array<i32>} : memref<16x128xf32, #tpu.memory_space<vmem>>, vector<16x128xf32>,
    return
  }
  func.func @transform_0(%arg0: i32) -> (i32, i32) {
    %c0_i32 = arith.constant 0 : i32
    %c0_i32_0 = arith.constant 0 : i32
    return %c0_i32, %arg0 : i32, i32
  }
  func.func @transform_1(%arg0: i32) -> (i32, i32) {
    %c0_i32 = arith.constant 0 : i32
    %c0_i32_0 = arith.constant 0 : i32
    %c0_i32_1 = arith.constant 0 : i32
    return %c0_i32, %c0_i32_0 : i32, i32
  }
  func.func @transform_2(%arg0: i32) -> (i32, i32) {
    %c0_i32 = arith.constant 0 : i32
    %c0_i32_0 = arith.constant 0 : i32
    %c0_i32_1 = arith.constant 0 : i32
    return %c0_i32, %c0_i32_0 : i32, i32
  }
  func.func @transform_3(%arg0: i32) -> (i32, i32) {
    %c0_i32 = arith.constant 0 : i32
    %c0_i32_0 = arith.constant 0 : i32
    %c0_i32_1 = arith.constant 0 : i32
    return %c0_i32, %c0_i32_0 : i32, i32
  }
  func.func @transform_4(%arg0: i32) -> (i32, i32) {
    %c0_i32 = arith.constant 0 : i32
    %c0_i32_0 = arith.constant 0 : i32
    %c0_i32_1 = arith.constant 0 : i32
    return %c0_i32, %c0_i32_0 : i32, i32
  }
  func.func @transform_5(%arg0: i32) -> (i32, i32) {
    %c0_i32 = arith.constant 0 : i32
    %c0_i32_0 = arith.constant 0 : i32
    return %c0_i32, %arg0 : i32, i32
  }
}

</mosaic_0001>

<llo_original>
// kernel: tpu_custom_call.1
$region0: #{tpu_custom_call.1}
  #allocation0 [shape = 'u32[]', space=smem, size = 0x4, offset = 0x4, fixed_abs, tag = 'smem constant byte address 0x4 - core index']
  #allocation1 [shape = 'u32[72,128]{1,0:T(1,128)}', space=vmem, size = 0x9000, scoped, tag = 'internal scratch']
  %s0 = inlined_call_operand.vmem [shape: f32[16,256], index: 0, kind: input, shape index: {}]
  %s1 = inlined_call_operand.hbm [shape: f32[16,16], index: 1, kind: input, shape index: {}]
  %s2 = inlined_call_operand.vmem [shape: f32[16,1], index: 2, kind: input, shape index: {}]
  %s3 = inlined_call_operand.hbm [shape: f32[16,16], index: 3, kind: input, shape index: {}]
  %s4 = inlined_call_operand.vmem [shape: f32[16,1], index: 4, kind: input, shape index: {}]
  %s5 = inlined_call_operand.hbm [shape: f32[16,256], index: 5, kind: output, shape index: {}]
  %s6 = sld [smem:[#allocation0]]
  $region99: #{tpu_custom_call.1} parent=0
    _
  %s8 = ssub.s32 1, %s6
  %s9 = scalar_select 0, %s8, %s6
  $region1: #{tpu_custom_call.1} parent=0
    #allocation2 [shape = 'u8[16384]{0}', space=vmem, size = 0x4000, scoped, tag = 'input window, operand 0']
    #allocation3 [shape = 'u8[8192]{0}', space=vmem, size = 0x2000, scoped, tag = 'input window, operand 1, single buffered']
    #allocation4 [shape = 's32[2]{0}', space=sflag, size = 0x8, scoped, tag = 'scoped memory for tpu_custom_call.1']
    #allocation5 [shape = 's32[2]{0}', space=sflag, size = 0x8, scoped, tag = 'scoped memory for tpu_custom_call.1']
    #allocation6 [shape = 'u8[8192]{0}', space=vmem, size = 0x2000, scoped, tag = 'input window, operand 3, single buffered']
    #allocation7 [shape = 's32[1]{0}', space=sflag, size = 0x4, scoped, tag = 'scoped memory for tpu_custom_call.1']
    #allocation8 [shape = 'u8[16384]{0}', space=vmem, size = 0x4000, scoped, tag = 'output window, operand 0']
    %10 = vsyncpa [#allocation4], 0
    %11 = vsyncpa [#allocation7], 0
    %12 = vsyncpa [#allocation5], 0
    %s13 = scalar_lea.sflag [#allocation5], 1
    %14 = vsyncpa %s13, 0
    loop: start=0, step=1, limit=4
    $region2: #{tpu_custom_call.1} parent=1 // loop_pre_header
      _
    $region3: #{tpu_custom_call.1} parent=1 // loop_header
      %s16 = sphi 0, %s20
      %p17 = scmp.ge.s32.totalorder %s16, 4
      %s26 = sphi 0, %s28
      %s29 = sphi 0, %s26
      %s30 = sphi 0, %s29
      %s46 = sphi 0, %s30
      %s50 = sphi 0, %s50
      %s52 = sphi 0, %s50
      %s53 = sphi 0, %s52
      %s67 = sphi 0, %s53
      %s71 = sphi 0, %s71
      %s73 = sphi 0, %s71
      %s74 = sphi 0, %s73
      %s88 = sphi 0, %s74
      %s92 = sphi 0, %s92
      %s94 = sphi 0, %s92
      %s95 = sphi 0, %s94
      %s109 = sphi 0, %s95
      %s113 = sphi 0, %s113
      %s115 = sphi 0, %s113
      %s116 = sphi 0, %s115
      %s130 = sphi 0, %s116
      %s136 = sphi 0, %s138
      %s139 = sphi 0, %s136
      %s140 = sphi 0, %s139
      %s156 = sphi 0, %s140
    $region4: #{tpu_custom_call.1} parent=1 // loop_header_branch
      %19 = sbr.rel (%p17) target = $region8
    $region5: #{tpu_custom_call.1} parent=1 // loop_body
      %s21 = ssub.s32 %s16, 1
      %s22 = ssub.s32 %s16, 2
      %s23 = sadd.s32 %s16, 1
      %s24 = ssub.s32 %s16, %s23
      %p25 = scmp.eq.s32.totalorder %s24, 0
      %s27 = sadd.s32 %s26, 1
      %s28 = scalar_select %p25, %s26, %s27
      %p31 = pneg %p25
      %p32 = scmp.eq.s32.totalorder %s16, 1
      %p33 = por %p31, %p32
      %p34 = scmp.ne.s32.totalorder %s26, %s29
      %p35 = scmp.eq.s32.totalorder %s16, 0
      %p36 = por %p34, %p35
      %p37 = scmp.ne.s32.totalorder %s26, %s29
      %p38 = scmp.eq.s32.totalorder %s21, 1
      %p39 = por %p37, %p38
      %p40 = scmp.ne.s32.totalorder %s29, %s30
      %p41 = scmp.eq.s32.totalorder %s21, 0
      %p42 = por %p40, %p41
      %p43 = scmp.ne.s32.totalorder %s29, %s30
      %p44 = scmp.eq.s32.totalorder %s22, 1
      %p45 = por %p43, %p44
      %p47 = scmp.ne.s32.totalorder %s30, %s46
      %p48 = scmp.eq.s32.totalorder %s22, 0
      %p49 = por %p47, %p48
      %s51 = sadd.s32 %s50, 1
      %p54 = scmp.eq.s32.totalorder %s16, 1
      %p55 = scmp.ne.s32.totalorder %s50, %s52
      %p56 = scmp.eq.s32.totalorder %s16, 0
      %p57 = por %p55, %p56
      %p58 = scmp.ne.s32.totalorder %s50, %s52
      %p59 = scmp.eq.s32.totalorder %s21, 1
      %p60 = por %p58, %p59
      %p61 = scmp.ne.s32.totalorder %s52, %s53
      %p62 = scmp.eq.s32.totalorder %s21, 0
      %p63 = por %p61, %p62
      %p64 = scmp.ne.s32.totalorder %s52, %s53
      %p65 = scmp.eq.s32.totalorder %s22, 1
      %p66 = por %p64, %p65
      %p68 = scmp.ne.s32.totalorder %s53, %s67
      %p69 = scmp.eq.s32.totalorder %s22, 0
      %p70 = por %p68, %p69
      %s72 = sadd.s32 %s71, 1
      %p75 = scmp.eq.s32.totalorder %s16, 1
      %p76 = scmp.ne.s32.totalorder %s71, %s73
      %p77 = scmp.eq.s32.totalorder %s16, 0
      %p78 = por %p76, %p77
      %p79 = scmp.ne.s32.totalorder %s71, %s73
      %p80 = scmp.eq.s32.totalorder %s21, 1
      %p81 = por %p79, %p80
      %p82 = scmp.ne.s32.totalorder %s73, %s74
      %p83 = scmp.eq.s32.totalorder %s21, 0
      %p84 = por %p82, %p83
      %p85 = scmp.ne.s32.totalorder %s73, %s74
      %p86 = scmp.eq.s32.totalorder %s22, 1
      %p87 = por %p85, %p86
      %p89 = scmp.ne.s32.totalorder %s74, %s88
      %p90 = scmp.eq.s32.totalorder %s22, 0
      %p91 = por %p89, %p90
      %s93 = sadd.s32 %s92, 1
      %p96 = scmp.eq.s32.totalorder %s16, 1
      %p97 = scmp.ne.s32.totalorder %s92, %s94
      %p98 = scmp.eq.s32.totalorder %s16, 0
      %p99 = por %p97, %p98
      %p100 = scmp.ne.s32.totalorder %s92, %s94
      %p101 = scmp.eq.s32.totalorder %s21, 1
      %p102 = por %p100, %p101
      %p103 = scmp.ne.s32.totalorder %s94, %s95
      %p104 = scmp.eq.s32.totalorder %s21, 0
      %p105 = por %p103, %p104
      %p106 = scmp.ne.s32.totalorder %s94, %s95
      %p107 = scmp.eq.s32.totalorder %s22, 1
      %p108 = por %p106, %p107
      %p110 = scmp.ne.s32.totalorder %s95, %s109
      %p111 = scmp.eq.s32.totalorder %s22, 0
      %p112 = por %p110, %p111
      %s114 = sadd.s32 %s113, 1
      %p117 = scmp.eq.s32.totalorder %s16, 1
      %p118 = scmp.ne.s32.totalorder %s113, %s115
      %p119 = scmp.eq.s32.totalorder %s16, 0
      %p120 = por %p118, %p119
      %p121 = scmp.ne.s32.totalorder %s113, %s115
      %p122 = scmp.eq.s32.totalorder %s21, 1
      %p123 = por %p121, %p122
      %p124 = scmp.ne.s32.totalorder %s115, %s116
      %p125 = scmp.eq.s32.totalorder %s21, 0
      %p126 = por %p124, %p125
      %p127 = scmp.ne.s32.totalorder %s115, %s116
      %p128 = scmp.eq.s32.totalorder %s22, 1
      %p129 = por %p127, %p128
      %p131 = scmp.ne.s32.totalorder %s116, %s130
      %p132 = scmp.eq.s32.totalorder %s22, 0
      %p133 = por %p131, %p132
      %s134 = ssub.s32 %s16, %s23
      %p135 = scmp.eq.s32.totalorder %s134, 0
      %s137 = sadd.s32 %s136, 1
      %s138 = scalar_select %p135, %s136, %s137
      %p141 = pneg %p135
      %p142 = scmp.eq.s32.totalorder %s16, 1
      %p143 = por %p141, %p142
      %p144 = scmp.ne.s32.totalorder %s136, %s139
      %p145 = scmp.eq.s32.totalorder %s16, 0
      %p146 = por %p144, %p145
      %p147 = scmp.ne.s32.totalorder %s136, %s139
      %p148 = scmp.eq.s32.totalorder %s21, 1
      %p149 = por %p147, %p148
      %p150 = scmp.ne.s32.totalorder %s139, %s140
      %p151 = scmp.eq.s32.totalorder %s21, 0
      %p152 = por %p150, %p151
      %p153 = scmp.ne.s32.totalorder %s139, %s140
      %p154 = scmp.eq.s32.totalorder %s22, 1
      %p155 = por %p153, %p154
      %p157 = scmp.ne.s32.totalorder %s140, %s156
      %p158 = scmp.eq.s32.totalorder %s22, 0
      %p159 = por %p157, %p158
      %p160 = scmp.le.s32.totalorder 1, %s16
      %p161 = scmp.lt.s32.totalorder %s16, 3
      %p162 = pnand %p160, %p161
      %p163 = pneg %p162
      // Predicated region
      $region9: #{tpu_custom_call.1} parent=5 // pred_check
        _
      $region10: #{tpu_custom_call.1} parent=5 // pred_check_branch
        %165 = sbr.rel (%p162) target = $region12
      $region11: #{tpu_custom_call.1} parent=5 // pred_region
        %s166 = ssub.s32 %s16, 1
        // Predicated region
        $region13: #{tpu_custom_call.1} parent=11 // pred_check
          %p167 = pneg %p63
        $region14: #{tpu_custom_call.1} parent=11 // pred_check_branch
          %169 = sbr.rel (%p167) target = $region16
        $region15: #{tpu_custom_call.1} parent=11 // pred_region
          %171 = vsyncadd [#allocation4], 0
          %s172 = sshll.u32 %s1, 4
          %s173 = int_to_ptr.hbm [resolvable:$true] %s172
          %s174 = sshll.u32 [#allocation3], 4
          %s175 = int_to_ptr.vmem [resolvable:$true] %s174
          %180 = dma.hbm_to_vmem [thread:$0]  %s173, 256, %s175, [#allocation4], 128, 128, 8
        $region16: #{tpu_custom_call.1} parent=11 // pred_fallthru
          _
        // Predicated region
        $region17: #{tpu_custom_call.1} parent=11 // pred_check
          %p181 = pneg %p84
        $region18: #{tpu_custom_call.1} parent=11 // pred_check_branch
          %183 = sbr.rel (%p181) target = $region20
        $region19: #{tpu_custom_call.1} parent=11 // pred_region
          _
        $region20: #{tpu_custom_call.1} parent=11 // pred_fallthru
          _
        // Predicated region
        $region21: #{tpu_custom_call.1} parent=11 // pred_check
          %p184 = pneg %p105
        $region22: #{tpu_custom_call.1} parent=11 // pred_check_branch
          %186 = sbr.rel (%p184) target = $region24
        $region23: #{tpu_custom_call.1} parent=11 // pred_region
          %188 = vsyncadd [#allocation7], 0
          %s189 = sshll.u32 %s3, 4
          %s190 = int_to_ptr.hbm [resolvable:$true] %s189
          %s191 = sshll.u32 [#allocation6], 4
          %s192 = int_to_ptr.vmem [resolvable:$true] %s191
          %197 = dma.hbm_to_vmem [thread:$0]  %s190, 256, %s192, [#allocation7], 128, 128, 8
        $region24: #{tpu_custom_call.1} parent=11 // pred_fallthru
          _
        // Predicated region
        $region25: #{tpu_custom_call.1} parent=11 // pred_check
          %p198 = pneg %p126
        $region26: #{tpu_custom_call.1} parent=11 // pred_check_branch
          %200 = sbr.rel (%p198) target = $region28
        $region27: #{tpu_custom_call.1} parent=11 // pred_region
          _
        $region28: #{tpu_custom_call.1} parent=11 // pred_fallthru
          _
      $region12: #{tpu_custom_call.1} parent=5 // pred_fallthru
        _
      %p201 = scmp.lt.s32.totalorder %s16, 2
      // Predicated region
      $region29: #{tpu_custom_call.1} parent=5 // pred_check
        %p202 = pneg %p201
      $region30: #{tpu_custom_call.1} parent=5 // pred_check_branch
        %204 = sbr.rel (%p202) target = $region32
      $region31: #{tpu_custom_call.1} parent=5 // pred_region
        // Predicated region
        $region33: #{tpu_custom_call.1} parent=31 // pred_check
          %p205 = pneg %p36
        $region34: #{tpu_custom_call.1} parent=31 // pred_check_branch
          %207 = sbr.rel (%p205) target = $region36
        $region35: #{tpu_custom_call.1} parent=31 // pred_region
          %s208 = sand.u32 %s26, 1
          %s209 = sand.u32 %s26, 1
          %s210 = smul.addr %s209, 16
          %s211 = scalar_lea.vmem [#allocation2], %s210
          %s212 = smul.addr %s16, 8
          %s213 = scalar_lea.vmem %s0, %s212
          // Predicated region
          $region37: #{tpu_custom_call.1} parent=35 // pred_check
            _
          $region38: #{tpu_custom_call.1} parent=35 // pred_check_branch
            %215 = sbr.rel (0) target = $region40
          $region39: #{tpu_custom_call.1} parent=35 // pred_region
            // Predicated region
            $region41: #{tpu_custom_call.1} parent=39 // pred_check
              _
            $region42: #{tpu_custom_call.1} parent=39 // pred_check_branch
              %217 = sbr.rel (0) target = $region44
            $region43: #{tpu_custom_call.1} parent=39 // pred_region
              // Predicated region
              $region56: #{tpu_custom_call.1} parent=43 // pred_check
                _
              $region57: #{tpu_custom_call.1} parent=43 // pred_check_branch
                %235 = sbr.rel (0) target = $region59
              $region58: #{tpu_custom_call.1} parent=43 // pred_region
                loop: start=0, step=1, limit=1
                $region60: #{tpu_custom_call.1} parent=58 // loop_pre_header
                  _
                $region61: #{tpu_custom_call.1} parent=58 // loop_header
                  %s237 = sphi 0, %s241
                  %p238 = scmp.ge.s32.totalorder %s237, 1
                  %s242 = sphi %s213, %s213
                  %s243 = sphi %s211, %s211
                $region62: #{tpu_custom_call.1} parent=58 // loop_header_branch
                  %240 = sbr.rel (%p238) target = $region66
                $region63: #{tpu_custom_call.1} parent=58 // loop_body
                  %v244 = vld [vmem:[%s242] sm:$0xff]
                  %245 = vst [vmem:[%s243] sm:$0xff] %v244
                  %v246 = vld [vmem:[%s242 + $0x10] sm:$0xff]
                  %247 = vst [vmem:[%s243 + $0x8] sm:$0xff] %v246
                $region64: #{tpu_custom_call.1} parent=58 // loop_footer
                  %s241 = sadd.s32 1, %s237
                $region65: #{tpu_custom_call.1} parent=58 // loop_footer_branch
                  %236 = sbr.rel target = $region61
                $region66: #{tpu_custom_call.1} parent=58 // loop_exit
                  _
              $region59: #{tpu_custom_call.1} parent=43 // pred_fallthru
                _
              // Predicated region
              $region67: #{tpu_custom_call.1} parent=43 // pred_check
                _
              $region68: #{tpu_custom_call.1} parent=43 // pred_check_branch
                %249 = sbr.rel target = $region70
              $region69: #{tpu_custom_call.1} parent=43 // pred_region
                _
              $region70: #{tpu_custom_call.1} parent=43 // pred_fallthru
                _
            $region44: #{tpu_custom_call.1} parent=39 // pred_fallthru
              _
            // Predicated region
            $region45: #{tpu_custom_call.1} parent=39 // pred_check
              _
            $region46: #{tpu_custom_call.1} parent=39 // pred_check_branch
              %219 = sbr.rel target = $region48
            $region47: #{tpu_custom_call.1} parent=39 // pred_region
              %s221 = ssub.s32 256, 1
              loop: start=0, step=1, limit=1
              $region49: #{tpu_custom_call.1} parent=47 // loop_pre_header
                _
              $region50: #{tpu_custom_call.1} parent=47 // loop_header
                %s223 = sphi 0, %s227
                %p224 = scmp.ge.s32.totalorder %s223, 1
                %s228 = sphi %s213, %s213
                %s229 = sphi %s211, %s211
              $region51: #{tpu_custom_call.1} parent=47 // loop_header_branch
                %226 = sbr.rel (%p224) target = $region55
              $region52: #{tpu_custom_call.1} parent=47 // loop_body
                %v230 = vld [vmem:[%s228] sm:%s221]
                %231 = vst [vmem:[%s229] sm:%s221] %v230
                %v232 = vld [vmem:[%s228 + $0x10] sm:%s221]
                %233 = vst [vmem:[%s229 + $0x8] sm:%s221] %v232
              $region53: #{tpu_custom_call.1} parent=47 // loop_footer
                %s227 = sadd.s32 1, %s223
              $region54: #{tpu_custom_call.1} parent=47 // loop_footer_branch
                %222 = sbr.rel target = $region50
              $region55: #{tpu_custom_call.1} parent=47 // loop_exit
                _
            $region48: #{tpu_custom_call.1} parent=39 // pred_fallthru
              _
          $region40: #{tpu_custom_call.1} parent=35 // pred_fallthru
            _
          %250 = vnop
        $region36: #{tpu_custom_call.1} parent=31 // pred_fallthru
          _
      $region32: #{tpu_custom_call.1} parent=5 // pred_fallthru
        _
      %p251 = scmp.le.s32.totalorder 1, %s16
      %p252 = scmp.lt.s32.totalorder %s16, 3
      %p253 = pnand %p251, %p252
      %p254 = pneg %p253
      // Predicated region
      $region71: #{tpu_custom_call.1} parent=5 // pred_check
        _
      $region72: #{tpu_custom_call.1} parent=5 // pred_check_branch
        %256 = sbr.rel (%p253) target = $region74
      $region73: #{tpu_custom_call.1} parent=5 // pred_region
        %s257 = ssub.s32 %s16, 1
        %s258 = sand.u32 %s29, 1
        %s259 = sand.u32 %s29, 1
        %s260 = smul.addr %s259, 16
        %s261 = scalar_lea.vmem [#allocation2], %s260
        // Predicated region
        $region75: #{tpu_custom_call.1} parent=73 // pred_check
          %p262 = pneg %p42
        $region76: #{tpu_custom_call.1} parent=73 // pred_check_branch
          %264 = sbr.rel (%p262) target = $region78
        $region77: #{tpu_custom_call.1} parent=73 // pred_region
          _
        $region78: #{tpu_custom_call.1} parent=73 // pred_fallthru
          _
        // Predicated region
        $region79: #{tpu_custom_call.1} parent=73 // pred_check
          %p265 = pneg %p63
        $region80: #{tpu_custom_call.1} parent=73 // pred_check_branch
          %267 = sbr.rel (%p265) target = $region82
        $region81: #{tpu_custom_call.1} parent=73 // pred_region
          %269 = dma.done [#allocation4], 256
        $region82: #{tpu_custom_call.1} parent=73 // pred_fallthru
          _
        // Predicated region
        $region83: #{tpu_custom_call.1} parent=73 // pred_check
          %p270 = pneg %p105
        $region84: #{tpu_custom_call.1} parent=73 // pred_check_branch
          %272 = sbr.rel (%p270) target = $region86
        $region85: #{tpu_custom_call.1} parent=73 // pred_region
          %274 = dma.done [#allocation7], 256
        $region86: #{tpu_custom_call.1} parent=73 // pred_fallthru
          _
        %s275 = sand.u32 %s29, 1
        %s276 = sand.u32 %s29, 1
        %s277 = smul.addr %s276, 16
        %s278 = scalar_lea.vmem [#allocation2], %s277
        %p279 = pneg %p42
        %p280 = pneg %p39
        %p281 = pneg %p63
        %p282 = pneg %p60
        %p283 = pneg %p84
        %p284 = pneg %p81
        %p285 = pneg %p105
        %p286 = pneg %p102
        %p287 = pneg %p126
        %p288 = pneg %p123
        %p289 = pneg %p152
        %p290 = pneg %p149
        %s291 = sand.u32 %s139, 1
        %s292 = scalar_lea.sflag [#allocation5], %s291
        %s293 = sand.u32 %s139, 1
        %s294 = smul.addr %s293, 16
        %s295 = scalar_lea.vmem [#allocation8], %s294
        %v296 = vld [vmem:[%s261] sm:$0xff]
        %v297 = vld [vmem:[%s261 + $0x8] sm:$0xff]
        %v298 = vmax.f32 %v296, 0.0
        %v299 = vmax.f32 %v297, 0.0
        %v300 = vld [vmem:[#allocation3] sm:$0xff]
        %v301 = vld [vmem:[#allocation3 + $0x8] sm:$0xff]
        %v302 = vld [vmem:[%s2] sm:$0xff]
        %v303 = vld [vmem:[%s2 + $0x8] sm:$0xff]
        %305 = vset.pattern.permute.xlu0 0
        %306 = vperm.xlu0 %305, %v302
        %v307 = vpop.permute.xlu0 %306
        %310 = vset.pattern.permute.xlu0 0
        %311 = vperm.xlu0 %310, %v303
        %v312 = vpop.permute.xlu0 %311
        %vm314 = vcmask 130048
        %v316 = vsel %vm314, %v300, 0
        %v319 = vsel %vm314, %v301, 0
        %321 = vmatpush.msra.mxu0 0.0
        %322 = vmatpush.msra.mxu0 0.0
        %323 = vmatpush.msra.mxu0 0.0
        %324 = vmatpush.msra.mxu0 0.0
        %325 = vmatpush.msra.mxu0 0.0
        %326 = vmatpush.msra.mxu0 0.0
        %327 = vmatpush.msra.mxu0 0.0
        %328 = vmatpush.msra.mxu0 0.0
        %329 = vmatpush.msra.mxu0 0.0
        %330 = vmatpush.msra.mxu0 0.0
        %331 = vmatpush.msra.mxu0 0.0
        %332 = vmatpush.msra.mxu0 0.0
        %333 = vmatpush.msra.mxu0 0.0
        %334 = vmatpush.msra.mxu0 0.0
        %335 = vmatpush.msra.mxu0 %v299
        %336 = vmatpush.msra.mxu0 %v298
        %337 = vmatmul.f32.gmra.mxu0 %v316
        %v338 = vpop.f32.mrf.mxu0
        %v339 = vadd.f32 %v307, %v338
        %340 = vmatmul.f32.gmra.mxu0 %v319
        %v341 = vpop.f32.mrf.mxu0
        %v342 = vadd.f32 %v312, %v341
        %343 = vdwg.mxu0
        %v344 = vmax.f32 %v339, 0.0
        %v345 = vmax.f32 %v342, 0.0
        %v346 = vld [vmem:[#allocation6] sm:$0xff]
        %v347 = vld [vmem:[#allocation6 + $0x8] sm:$0xff]
        %v348 = vld [vmem:[%s4] sm:$0xff]
        %v349 = vld [vmem:[%s4 + $0x8] sm:$0xff]
        %351 = vset.pattern.permute.xlu0 0
        %352 = vperm.xlu0 %351, %v348
        %v353 = vpop.permute.xlu0 %352
        %356 = vset.pattern.permute.xlu0 0
        %357 = vperm.xlu0 %356, %v349
        %v358 = vpop.permute.xlu0 %357
        %v361 = vsel %vm314, %v346, 0
        %v364 = vsel %vm314, %v347, 0
        %366 = vmatpush.msra.mxu0 0.0
        %367 = vmatpush.msra.mxu0 0.0
        %368 = vmatpush.msra.mxu0 0.0
        %369 = vmatpush.msra.mxu0 0.0
        %370 = vmatpush.msra.mxu0 0.0
        %371 = vmatpush.msra.mxu0 0.0
        %372 = vmatpush.msra.mxu0 0.0
        %373 = vmatpush.msra.mxu0 0.0
        %374 = vmatpush.msra.mxu0 0.0
        %375 = vmatpush.msra.mxu0 0.0
        %376 = vmatpush.msra.mxu0 0.0
        %377 = vmatpush.msra.mxu0 0.0
        %378 = vmatpush.msra.mxu0 0.0
        %379 = vmatpush.msra.mxu0 0.0
        %380 = vmatpush.msra.mxu0 %v345
        %381 = vmatpush.msra.mxu0 %v344
        %382 = vmatmul.f32.gmra.mxu0 %v361
        %v383 = vpop.f32.mrf.mxu0
        %v384 = vadd.f32 %v353, %v383
        %385 = vmatmul.f32.gmra.mxu0 %v364
        %v386 = vpop.f32.mrf.mxu0
        %v387 = vadd.f32 %v358, %v386
        %388 = vdwg.mxu0
        %v389 = vmax.f32 %v384, %v387
        %v390 = vrot.slane %v389, 4
        %v391 = vmax.f32 %v389, %v390
        %v392 = vrot.slane %v391, 2
        %v393 = vmax.f32 %v391, %v392
        %v394 = vrot.slane %v393, 1
        %v395 = vmax.f32 %v393, %v394
        %v396 = vsub.f32 %v384, %v395
        %v397 = vsub.f32 %v387, %v395
        %v398 = vmul.f32 %v396, 1.442695
        %v399 = vpow.pop %v398
        %v400 = vmul.f32 %v397, 1.442695
        %v401 = vpow.pop %v400
        %v402 = vadd.f32 %v399, %v401
        %v403 = vrot.slane %v402, 4
        %v404 = vadd.f32 %v402, %v403
        %v405 = vrot.slane %v404, 2
        %v406 = vadd.f32 %v404, %v405
        %v407 = vrot.slane %v406, 1
        %v408 = vadd.f32 %v406, %v407
        %v409 = vrcp.pop %v408
        %v410 = vmul.f32 %v408, %v409
        %v411 = vsub.f32 1.0, %v410
        %v412 = vmul.f32 %v409, %v411
        %v413 = vadd.f32 %v409, %v412
        %vm414 = vweird.f32 %v408
        %vm415 = vweird.f32 %v409
        %vm416 = vmor %vm414, %vm415
        %v417 = vsel %vm416, %v409, %v413
        %v418 = vand.u32 2147483647, %v408
        %vm419 = vcmp.eq.f32.partialorder %v418, 8.507059e+37
        %v420 = vand.u32 %v408, 2147483648
        %v421 = vor.u32 1.1754944e-38, %v420
        %v422 = vsel %vm419, %v421, %v417
        %v423 = vmul.f32 %v399, %v422
        %v424 = vmul.f32 %v401, %v422
        %425 = vst [vmem:[%s295] sm:$0xff] %v423
        %426 = vst [vmem:[%s295 + $0x8] sm:$0xff] %v424
        %s427 = sand.u32 %s139, 1
        %s428 = scalar_lea.sflag [#allocation5], %s427
        %s429 = sand.u32 %s139, 1
        %s430 = smul.addr %s429, 16
        %s431 = scalar_lea.vmem [#allocation8], %s430
        // Predicated region
        $region87: #{tpu_custom_call.1} parent=73 // pred_check
          %p432 = pneg %p149
        $region88: #{tpu_custom_call.1} parent=73 // pred_check_branch
          %434 = sbr.rel (%p432) target = $region90
        $region89: #{tpu_custom_call.1} parent=73 // pred_region
          %436 = vsyncadd %s428, 0
          %s437 = smul.addr %s21, 8
          %s438 = scalar_lea.hbm %s5, %s437
          %s439 = sshll.u32 %s431, 4
          %s440 = int_to_ptr.vmem [resolvable:$true] %s439
          %s441 = sshll.u32 %s438, 4
          %s442 = int_to_ptr.hbm [resolvable:$true] %s441
          %447 = dma.vmem_to_hbm [thread:$0]  %s440, 256, %s442, %s428, 128, 256, 8
        $region90: #{tpu_custom_call.1} parent=73 // pred_fallthru
          _
      $region74: #{tpu_custom_call.1} parent=5 // pred_fallthru
        _
      %p448 = scmp.le.s32.totalorder 2, %s16
      // Predicated region
      $region91: #{tpu_custom_call.1} parent=5 // pred_check
        %p449 = pneg %p448
      $region92: #{tpu_custom_call.1} parent=5 // pred_check_branch
        %451 = sbr.rel (%p449) target = $region94
      $region93: #{tpu_custom_call.1} parent=5 // pred_region
        %s452 = ssub.s32 %s16, 2
        // Predicated region
        $region95: #{tpu_custom_call.1} parent=93 // pred_check
          %p453 = pneg %p155
        $region96: #{tpu_custom_call.1} parent=93 // pred_check_branch
          %455 = sbr.rel (%p453) target = $region98
        $region97: #{tpu_custom_call.1} parent=93 // pred_region
          %s456 = sand.u32 %s140, 1
          %s457 = scalar_lea.sflag [#allocation5], %s456
          %s458 = sand.u32 %s140, 1
          %s459 = smul.addr %s458, 16
          %s460 = scalar_lea.vmem [#allocation8], %s459
          %462 = dma.done %s457, 256
        $region98: #{tpu_custom_call.1} parent=93 // pred_fallthru
          _
      $region94: #{tpu_custom_call.1} parent=5 // pred_fallthru
        _
    $region6: #{tpu_custom_call.1} parent=1 // loop_footer
      %s20 = sadd.s32 1, %s16
    $region7: #{tpu_custom_call.1} parent=1 // loop_footer_branch
      %15 = sbr.rel target = $region3
    $region8: #{tpu_custom_call.1} parent=1 // loop_exit
      _
    %463 = vsyncpa [#allocation4], 1
    %s464 = scalar_lea.sflag [#allocation4], 1
    %465 = vsyncpa %s464, 1
    %466 = vsyncpa [#allocation7], 1
    %467 = vsyncpa [#allocation5], 1
    %s468 = scalar_lea.sflag [#allocation5], 1
    %469 = vsyncpa %s468, 1

</llo_original>
